<compile_context>
chip_gen: v7x
topology: tpu7x:2x2x1
jax: 0.10.0
libtpu: 0.0.40
codegen_flags: <defaults>
</compile_context>

<pallas_src>
import jax
import jax.numpy as jnp
from jax import lax
from jax.experimental import pallas as pl
from jax.experimental.pallas import tpu as pltpu

EPS = 1e-12  # matches torch.nn.functional.normalize default eps


def _round_up(x, m):
    return ((x + m - 1) // m) * m


def _unit_norm_linear_kernel(x_ref, w_ref, b_ref, o_ref, inv_norm_ref):
    # The batch axis is the inner grid dimension, so the W tile only changes when
    # program_id(1) wraps to 0. Recompute the cached per-row inverse norm only then.
    @pl.when(pl.program_id(1) == 0)
    def _():
        w32 = w_ref[...].astype(jnp.float32)          # f32 only for the reduction math
        sumsq = jnp.sum(w32 * w32, axis=-1)           # (TN,) row sum-of-squares (XLU)
        # 1 / max(||w||, EPS)  ==  rsqrt(max(sumsq, EPS^2)); rsqrt runs on the EUP slot.
        inv_norm_ref[...] = lax.rsqrt(jnp.maximum(sumsq, EPS * EPS)).reshape(1, -1)

    # y[b, n] = sum_k x[b, k] * W[n, k]  -- MXU matmul with transposed-RHS contraction,
    # native-dtype operands, f32 accumulation. No transpose, no normalized-W copy.
    y = lax.dot_general(
        x_ref[...], w_ref[...],
        dimension_numbers=(((1,), (1,)), ((), ())),
        preferred_element_type=jnp.float32,
    )
    # Fold the unit-norm constraint into a per-column scale, then add bias (epilogue only).
    y = y * inv_norm_ref[...] + b_ref[...].astype(jnp.float32)
    o_ref[...] = y.astype(o_ref.dtype)


def constrained_unit_norm_linear(x, weight, bias=None, *, tb=None, tn=None,
                                 vmem_limit_bytes=None):
    """x: (B, in_features); weight: (out_features, in_features); bias: (out_features,) or None."""
    B, K = x.shape
    N, K2 = weight.shape
    assert K == K2, "in_features mismatch between x and weight"
    if bias is None:
        bias = jnp.zeros((N,), dtype=x.dtype)

    K_pad = _round_up(K, 128)
    itemsize = max(jnp.dtype(x.dtype).itemsize, jnp.dtype(weight.dtype).itemsize)

    def footprint(tb_, tn_):
        # 2x for double buffering of each pipelined operand + output; f32 for the output tile.
        return 2 * ((tb_ * K_pad + tn_ * K_pad) * itemsize + tb_ * tn_ * 4)

    # --- choose tile sizes (double-buffered footprint kept well under physical VMEM on all
    #     generations, including v7x's smaller 64 MiB VMEM) ---
    TB, TN = 256, 512
    if tb is None or tn is None:
        budget = 24 * 1024 * 1024
        while footprint(TB, TN) > budget and TN > 128:
            TN //= 2
        while footprint(TB, TN) > budget and TB > 8:
            TB //= 2
    if tb is not None:
        TB = tb
    if tn is not None:
        TN = tn
    TB = min(TB, _round_up(B, 8))      # sublane-aligned batch tile
    TN = min(TN, _round_up(N, 128))    # lane-aligned output tile (no masked stores)

    B_pad = _round_up(B, TB)
    N_pad = _round_up(N, TN)

    # --- zero-pad to tile multiples (neutral: padded W rows / x cols contribute 0) ---
    x_p = x if (B_pad == B and K_pad == K) else jnp.pad(x, ((0, B_pad - B), (0, K_pad - K)))
    w_p = weight if (N_pad == N and K_pad == K) else jnp.pad(weight, ((0, N_pad - N), (0, K_pad - K)))
    b_p = bias if N_pad == N else jnp.pad(bias, (0, N_pad - N))
    b2d = b_p.reshape(1, N_pad)

    grid = (N_pad // TN, B_pad // TB)  # N outer (parallel), batch inner (W-tile reuse)

    if vmem_limit_bytes is None:
        # Explicit scoped-VMEM limit derived from the actual footprint (plus margin for the
        # bias tile, the inv-norm scratch and semaphores); capped below v7x physical VMEM.
        vmem_limit_bytes = min(48 * 1024 * 1024, footprint(TB, TN) + 2 * 1024 * 1024)

    cost = pl.CostEstimate(
        flops=2 * B_pad * N_pad * K_pad,
        transcendentals=N_pad,  # rsqrt per output row of W
        bytes_accessed=(B_pad * K_pad + N_pad * K_pad + N_pad) * itemsize
        + B_pad * N_pad * jnp.dtype(x.dtype).itemsize,
    )

    out = pl.pallas_call(
        _unit_norm_linear_kernel,
        out_shape=jax.ShapeDtypeStruct((B_pad, N_pad), x.dtype),
        grid_spec=pltpu.PrefetchScalarGridSpec(
            num_scalar_prefetch=0,
            grid=grid,
            in_specs=[
                pl.BlockSpec((TB, K_pad), lambda n, b: (b, 0)),   # x tile
                pl.BlockSpec((TN, K_pad), lambda n, b: (n, 0)),   # W tile (constant over b)
                pl.BlockSpec((1, TN), lambda n, b: (0, n)),       # bias tile
            ],
            out_specs=pl.BlockSpec((TB, TN), lambda n, b: (b, n)),
            scratch_shapes=[pltpu.VMEM((1, TN), jnp.float32)],    # cached 1/||W_row||
        ),
        compiler_params=pltpu.CompilerParams(
            dimension_semantics=("parallel", "arbitrary"),
            vmem_limit_bytes=vmem_limit_bytes,
        ),
        cost_estimate=cost,
    )(x_p, w_p, b2d)

    return out[:B, :N]


def init_params(key, in_features, out_features, dtype=jnp.float32):
    """Deterministic init mirroring ConstrainedUnitNormLinear.reset_parameters."""
    kw, kb = jax.random.split(key)
    w = jax.random.normal(kw, (out_features, in_features), dtype=dtype)
    w = w / jnp.maximum(jnp.linalg.norm(w, axis=-1, keepdims=True), EPS)
    bound = 1.0 / jnp.sqrt(in_features) if in_features > 0 else 0.0
    b = jax.random.uniform(kb, (out_features,), dtype=dtype, minval=-bound, maxval=bound)
    return w, b


if __name__ == "__main__":
    key = jax.random.PRNGKey(0)
    kx, kp = jax.random.split(key)

    batch = 32
    in_features = 64
    out_features = 512

    x = jax.random.normal(kx, (batch, in_features), dtype=jnp.float32)
    weight, bias = init_params(kp, in_features, out_features)
    # Scale W away from unit norm so the kernel's normalization is actually exercised.
    weight = weight * 3.7

    # Pure-JAX reference.
    w_n = weight / jnp.maximum(jnp.linalg.norm(weight, axis=-1, keepdims=True), EPS)
    ref = x @ w_n.T + bias

    # Small explicit tiles -> exercises the multi-tile grid (4 x 4), padding (K 64->128),
    # and the per-W-tile inv-norm cache across batch tiles.
    out = constrained_unit_norm_linear(x, weight, bias, tb=8, tn=128)
    out = jax.block_until_ready(out)
    assert out.shape == (batch, out_features)
    assert jnp.allclose(out, ref, atol=1e-5, rtol=1e-5)

    # Default (auto) tile sizes path.
    out2 = jax.block_until_ready(constrained_unit_norm_linear(x, weight, bias))
    assert jnp.allclose(out2, ref, atol=1e-5, rtol=1e-5)

    # No-bias path (module supports bias=False).
    ref_nb = x @ w_n.T
    out3 = jax.block_until_ready(constrained_unit_norm_linear(x, weight, None))
    assert jnp.allclose(out3, ref_nb, atol=1e-5, rtol=1e-5)

    print("KERNEL_OK")
</pallas_src>

<mosaic_0001>
module attributes {stable_mosaic.version = 11 : i64} {
  func.func @_unit_norm_linear_kernel(%arg0: i32, %arg1: i32, %arg2: memref<8x128xf32, #tpu.memory_space<vmem>>, %arg3: memref<128x128xf32, #tpu.memory_space<vmem>>, %arg4: memref<1x128xf32, #tpu.memory_space<vmem>>, %arg5: memref<8x128xf32, #tpu.memory_space<vmem>>, %arg6: memref<1x128xf32, #tpu.memory_space<vmem>>) attributes {dimension_semantics = [#tpu.dimension_semantics<parallel>, #tpu.dimension_semantics<arbitrary>], iteration_bounds = array<i64: 4, 4>, scalar_prefetch = 0 : i64, scratch_operands = 1 : i64, tpu.core_type = #tpu.core_type<tc>, window_params = [{transform_indices = @transform_0, window_bounds = array<i64: 8, 128>}, {transform_indices = @transform_1, window_bounds = array<i64: 128, 128>}, {transform_indices = @transform_2, window_bounds = array<i64: 1, 128>}, {transform_indices = @transform_3, window_bounds = array<i64: 8, 128>}]} {
    %c0_i32 = arith.constant 0 : i32
    %0 = arith.cmpi eq, %arg1, %c0_i32 : i32
    %1 = arith.extui %0 : i1 to i32
    %c0_i32_0 = arith.constant 0 : i32
    %2 = arith.cmpi ne, %1, %c0_i32_0 : i32
    scf.if %2 {
      %c0_10 = arith.constant 0 : index
      %c0_11 = arith.constant 0 : index
      %13 = vector.load %arg3[%c0_10, %c0_11] : memref<128x128xf32, #tpu.memory_space<vmem>>, vector<128x128xf32>
      %14 = arith.mulf %13, %13 : vector<128x128xf32>
      %cst_12 = arith.constant dense<0.000000e+00> : vector<128xf32>
      %15 = vector.multi_reduction <add>, %14, %cst_12 [1] : vector<128x128xf32> to vector<128xf32>
      %cst_13 = arith.constant 1.000000e-24 : f32
      %16 = vector.broadcast %cst_13 : f32 to vector<128xf32>
      %17 = arith.maximumf %15, %16 : vector<128xf32>
      %18 = math.rsqrt %17 : vector<128xf32>
      %19 = vector.shape_cast %18 : vector<128xf32> to vector<1x128xf32>
      %c0_14 = arith.constant 0 : index
      %c0_15 = arith.constant 0 : index
      %20 = vector.load %arg6[%c0_14, %c0_15] : memref<1x128xf32, #tpu.memory_space<vmem>>, vector<1x128xf32>
      tpu.vector_store %arg6[%c0_14, %c0_15], %19 {strides = array<i32>} : memref<1x128xf32, #tpu.memory_space<vmem>>, vector<1x128xf32>,
    } else {
    }
    %c0 = arith.constant 0 : index
    %c0_1 = arith.constant 0 : index
    %3 = vector.load %arg2[%c0, %c0_1] : memref<8x128xf32, #tpu.memory_space<vmem>>, vector<8x128xf32>
    %c0_2 = arith.constant 0 : index
    %c0_3 = arith.constant 0 : index
    %4 = vector.load %arg3[%c0_2, %c0_3] : memref<128x128xf32, #tpu.memory_space<vmem>>, vector<128x128xf32>
    %cst = arith.constant dense<0.000000e+00> : vector<8x128xf32>
    %5 = tpu.matmul %3, %4, %cst {dimension_numbers = #tpu.dot_dimension_numbers<[1], [1], [0], [0], [0, 0, 1, 0], [], []>} : vector<8x128xf32>, vector<128x128xf32>, vector<8x128xf32> -> vector<8x128xf32>
    %c0_4 = arith.constant 0 : index
    %c0_5 = arith.constant 0 : index
    %6 = vector.load %arg6[%c0_4, %c0_5] : memref<1x128xf32, #tpu.memory_space<vmem>>, vector<1x128xf32>
    %7 = vector.broadcast %6 : vector<1x128xf32> to vector<8x128xf32>
    %8 = arith.mulf %5, %7 : vector<8x128xf32>
    %c0_6 = arith.constant 0 : index
    %c0_7 = arith.constant 0 : index
    %9 = vector.load %arg4[%c0_6, %c0_7] : memref<1x128xf32, #tpu.memory_space<vmem>>, vector<1x128xf32>
    %10 = vector.broadcast %9 : vector<1x128xf32> to vector<8x128xf32>
    %11 = arith.addf %8, %10 : vector<8x128xf32>
    %c0_8 = arith.constant 0 : index
    %c0_9 = arith.constant 0 : index
    %12 = vector.load %arg5[%c0_8, %c0_9] : memref<8x128xf32, #tpu.memory_space<vmem>>, vector<8x128xf32>
    tpu.vector_store %arg5[%c0_8, %c0_9], %11 {strides = array<i32>} : memref<8x128xf32, #tpu.memory_space<vmem>>, vector<8x128xf32>,
    return
  }
  func.func @transform_0(%arg0: i32, %arg1: i32) -> (i32, i32) {
    %c0_i32 = arith.constant 0 : i32
    %c0_i32_0 = arith.constant 0 : i32
    return %arg1, %c0_i32 : i32, i32
  }
  func.func @transform_1(%arg0: i32, %arg1: i32) -> (i32, i32) {
    %c0_i32 = arith.constant 0 : i32
    %c0_i32_0 = arith.constant 0 : i32
    return %arg0, %c0_i32 : i32, i32
  }
  func.func @transform_2(%arg0: i32, %arg1: i32) -> (i32, i32) {
    %c0_i32 = arith.constant 0 : i32
    %c0_i32_0 = arith.constant 0 : i32
    return %c0_i32, %arg0 : i32, i32
  }
  func.func @transform_3(%arg0: i32, %arg1: i32) -> (i32, i32) {
    %c0_i32 = arith.constant 0 : i32
    return %arg1, %arg0 : i32, i32
  }
}

</mosaic_0001>

<llo_original>
// kernel: tpu_custom_call.1
$region0: #{tpu_custom_call.1}
  #allocation0 [shape = 'u32[]', space=smem, size = 0x4, offset = 0x4, fixed_abs, tag = 'smem constant byte address 0x4 - core index']
  #allocation1 [shape = 'u32[144,128]{1,0:T(1,128)}', space=vmem, size = 0x12000, scoped, tag = 'internal scratch']
  #allocation2 [shape = 'f32[1,128]{1,0:T(1,128)}', space=vmem, size = 0x200, scoped, tag = 'scratch operand']
  %s0 = inlined_call_operand.hbm [shape: f32[32,128], index: 0, kind: input, shape index: {}]
  %s1 = inlined_call_operand.hbm [shape: f32[512,128], index: 1, kind: input, shape index: {}]
  %s2 = inlined_call_operand.vmem [shape: f32[1,512], index: 2, kind: input, shape index: {}]
  %s3 = inlined_call_operand.hbm [shape: f32[32,512], index: 3, kind: output, shape index: {}]
  %s4 = sld [smem:[#allocation0]]
  $region57: #{tpu_custom_call.1} parent=0
    _
  %s6 = ssub.s32 1, %s4
  %s7 = scalar_select 0, %s6, %s4
  $region1: #{tpu_custom_call.1} parent=0
    #allocation3 [shape = 'u8[8192]{0}', space=vmem, size = 0x2000, scoped, tag = 'input window, operand 0']
    #allocation4 [shape = 's32[2]{0}', space=sflag, size = 0x8, scoped, tag = 'scoped memory for tpu_custom_call.1']
    #allocation5 [shape = 's32[2]{0}', space=sflag, size = 0x8, scoped, tag = 'scoped memory for tpu_custom_call.1']
    #allocation6 [shape = 'u8[131072]{0}', space=vmem, size = 0x20000, scoped, tag = 'input window, operand 1']
    #allocation7 [shape = 's32[2]{0}', space=sflag, size = 0x8, scoped, tag = 'scoped memory for tpu_custom_call.1']
    #allocation8 [shape = 'u8[8192]{0}', space=vmem, size = 0x2000, scoped, tag = 'output window, operand 0']
    %8 = vsyncpa [#allocation4], 0
    %s9 = scalar_lea.sflag [#allocation4], 1
    %10 = vsyncpa %s9, 0
    %11 = vsyncpa [#allocation7], 0
    %s12 = scalar_lea.sflag [#allocation7], 1
    %13 = vsyncpa %s12, 0
    %14 = vsyncpa [#allocation5], 0
    %s15 = scalar_lea.sflag [#allocation5], 1
    %16 = vsyncpa %s15, 0
    loop: start=0, step=1, limit=18
    $region2: #{tpu_custom_call.1} parent=1 // loop_pre_header
      _
    $region3: #{tpu_custom_call.1} parent=1 // loop_header
      %s18 = sphi 0, %s22
      %p19 = scmp.ge.s32.totalorder %s18, 18
      %s25 = sphi 0, %s37
      %s26 = sphi 0, %s33
      %s27 = sphi 0, %s25
      %s28 = sphi 0, %s26
      %s29 = sphi 0, %s27
      %s30 = sphi 0, %s28
      %s40 = sphi 0, %s42
      %s43 = sphi 0, %s40
      %s44 = sphi 0, %s43
      %s60 = sphi 0, %s44
      %s66 = sphi 0, %s68
      %s69 = sphi 0, %s66
      %s70 = sphi 0, %s69
      %s86 = sphi 0, %s70
      %s92 = sphi 0, %s94
      %s95 = sphi 0, %s92
      %s96 = sphi 0, %s95
      %s112 = sphi 0, %s96
      %s120 = sphi 0, %s122
      %s123 = sphi 0, %s120
      %s124 = sphi 0, %s123
      %s140 = sphi 0, %s124
    $region4: #{tpu_custom_call.1} parent=1 // loop_header_branch
      %21 = sbr.rel (%p19) target = $region8
    $region5: #{tpu_custom_call.1} parent=1 // loop_body
      %s23 = ssub.s32 %s18, 1
      %s24 = ssub.s32 %s18, 2
      %s31 = sadd.s32 1, %s26
      %p32 = scmp.ge.s32.totalorder %s31, 4
      %s33 = scalar_select %p32, 0, %s31
      %s34 = sadd.s32 1, %s25
      %s35 = scalar_select %p32, %s34, %s25
      %p36 = scmp.ge.s32.totalorder %s35, 4
      %s37 = scalar_select %p36, 0, %s35
      %s38 = ssub.s32 %s26, %s33
      %p39 = scmp.eq.s32.totalorder %s38, 0
      %s41 = sadd.s32 %s40, 1
      %s42 = scalar_select %p39, %s40, %s41
      %p45 = pneg %p39
      %p46 = scmp.eq.s32.totalorder %s18, 15
      %p47 = por %p45, %p46
      %p48 = scmp.ne.s32.totalorder %s40, %s43
      %p49 = scmp.eq.s32.totalorder %s18, 0
      %p50 = por %p48, %p49
      %p51 = scmp.ne.s32.totalorder %s40, %s43
      %p52 = scmp.eq.s32.totalorder %s23, 15
      %p53 = por %p51, %p52
      %p54 = scmp.ne.s32.totalorder %s43, %s44
      %p55 = scmp.eq.s32.totalorder %s23, 0
      %p56 = por %p54, %p55
      %p57 = scmp.ne.s32.totalorder %s43, %s44
      %p58 = scmp.eq.s32.totalorder %s24, 15
      %p59 = por %p57, %p58
      %p61 = scmp.ne.s32.totalorder %s44, %s60
      %p62 = scmp.eq.s32.totalorder %s24, 0
      %p63 = por %p61, %p62
      %s64 = ssub.s32 %s25, %s37
      %p65 = scmp.eq.s32.totalorder %s64, 0
      %s67 = sadd.s32 %s66, 1
      %s68 = scalar_select %p65, %s66, %s67
      %p71 = pneg %p65
      %p72 = scmp.eq.s32.totalorder %s18, 15
      %p73 = por %p71, %p72
      %p74 = scmp.ne.s32.totalorder %s66, %s69
      %p75 = scmp.eq.s32.totalorder %s18, 0
      %p76 = por %p74, %p75
      %p77 = scmp.ne.s32.totalorder %s66, %s69
      %p78 = scmp.eq.s32.totalorder %s23, 15
      %p79 = por %p77, %p78
      %p80 = scmp.ne.s32.totalorder %s69, %s70
      %p81 = scmp.eq.s32.totalorder %s23, 0
      %p82 = por %p80, %p81
      %p83 = scmp.ne.s32.totalorder %s69, %s70
      %p84 = scmp.eq.s32.totalorder %s24, 15
      %p85 = por %p83, %p84
      %p87 = scmp.ne.s32.totalorder %s70, %s86
      %p88 = scmp.eq.s32.totalorder %s24, 0
      %p89 = por %p87, %p88
      %s90 = ssub.s32 %s25, %s37
      %p91 = scmp.eq.s32.totalorder %s90, 0
      %s93 = sadd.s32 %s92, 1
      %s94 = scalar_select %p91, %s92, %s93
      %p97 = pneg %p91
      %p98 = scmp.eq.s32.totalorder %s18, 15
      %p99 = por %p97, %p98
      %p100 = scmp.ne.s32.totalorder %s92, %s95
      %p101 = scmp.eq.s32.totalorder %s18, 0
      %p102 = por %p100, %p101
      %p103 = scmp.ne.s32.totalorder %s92, %s95
      %p104 = scmp.eq.s32.totalorder %s23, 15
      %p105 = por %p103, %p104
      %p106 = scmp.ne.s32.totalorder %s95, %s96
      %p107 = scmp.eq.s32.totalorder %s23, 0
      %p108 = por %p106, %p107
      %p109 = scmp.ne.s32.totalorder %s95, %s96
      %p110 = scmp.eq.s32.totalorder %s24, 15
      %p111 = por %p109, %p110
      %p113 = scmp.ne.s32.totalorder %s96, %s112
      %p114 = scmp.eq.s32.totalorder %s24, 0
      %p115 = por %p113, %p114
      %s116 = ssub.s32 %s26, %s33
      %s117 = ssub.s32 %s25, %s37
      %s118 = sor.u32 %s116, %s117
      %p119 = scmp.eq.s32.totalorder %s118, 0
      %s121 = sadd.s32 %s120, 1
      %s122 = scalar_select %p119, %s120, %s121
      %p125 = pneg %p119
      %p126 = scmp.eq.s32.totalorder %s18, 15
      %p127 = por %p125, %p126
      %p128 = scmp.ne.s32.totalorder %s120, %s123
      %p129 = scmp.eq.s32.totalorder %s18, 0
      %p130 = por %p128, %p129
      %p131 = scmp.ne.s32.totalorder %s120, %s123
      %p132 = scmp.eq.s32.totalorder %s23, 15
      %p133 = por %p131, %p132
      %p134 = scmp.ne.s32.totalorder %s123, %s124
      %p135 = scmp.eq.s32.totalorder %s23, 0
      %p136 = por %p134, %p135
      %p137 = scmp.ne.s32.totalorder %s123, %s124
      %p138 = scmp.eq.s32.totalorder %s24, 15
      %p139 = por %p137, %p138
      %p141 = scmp.ne.s32.totalorder %s124, %s140
      %p142 = scmp.eq.s32.totalorder %s24, 0
      %p143 = por %p141, %p142
      %p144 = scmp.le.s32.totalorder 1, %s18
      %p145 = scmp.lt.s32.totalorder %s18, 17
      %p146 = pnand %p144, %p145
      %p147 = pneg %p146
      // Predicated region
      $region9: #{tpu_custom_call.1} parent=5 // pred_check
        _
      $region10: #{tpu_custom_call.1} parent=5 // pred_check_branch
        %149 = sbr.rel (%p146) target = $region12
      $region11: #{tpu_custom_call.1} parent=5 // pred_region
        %s150 = ssub.s32 %s18, 1
      $region12: #{tpu_custom_call.1} parent=5 // pred_fallthru
        _
      %p151 = scmp.lt.s32.totalorder %s18, 16
      // Predicated region
      $region13: #{tpu_custom_call.1} parent=5 // pred_check
        %p152 = pneg %p151
      $region14: #{tpu_custom_call.1} parent=5 // pred_check_branch
        %154 = sbr.rel (%p152) target = $region16
      $region15: #{tpu_custom_call.1} parent=5 // pred_region
        // Predicated region
        $region17: #{tpu_custom_call.1} parent=15 // pred_check
          %p155 = pneg %p50
        $region18: #{tpu_custom_call.1} parent=15 // pred_check_branch
          %157 = sbr.rel (%p155) target = $region20
        $region19: #{tpu_custom_call.1} parent=15 // pred_region
          %s158 = sand.u32 %s40, 1
          %s159 = scalar_lea.sflag [#allocation4], %s158
          %s160 = sand.u32 %s40, 1
          %s161 = smul.addr %s160, 8
          %s162 = scalar_lea.vmem [#allocation3], %s161
          %s164 = ssub.s32 128, 128
          %165 = vsyncadd %s159, %s164
          %s166 = smul.addr %s26, 128
          %s167 = scalar_lea.hbm %s0, %s166
          %s169 = sshll.u32 %s162, 4
          %s170 = int_to_ptr.vmem [resolvable:$true] %s169
          %172 = dma.hbm_to_vmem [thread:$0]  %s167, 128, %s170, %s159
        $region20: #{tpu_custom_call.1} parent=15 // pred_fallthru
          _
        // Predicated region
        $region21: #{tpu_custom_call.1} parent=15 // pred_check
          %p173 = pneg %p76
        $region22: #{tpu_custom_call.1} parent=15 // pred_check_branch
          %175 = sbr.rel (%p173) target = $region24
        $region23: #{tpu_custom_call.1} parent=15 // pred_region
          %s176 = sand.u32 %s66, 1
          %s177 = scalar_lea.sflag [#allocation7], %s176
          %s178 = sand.u32 %s66, 1
          %s179 = smul.addr %s178, 128
          %s180 = scalar_lea.vmem [#allocation6], %s179
          %s181 = smul.u32 16, %s25
          %s183 = ssub.s32 2048, 2048
          %184 = vsyncadd %s177, %s183
          %s185 = smul.addr %s181, 128
          %s186 = scalar_lea.hbm %s1, %s185
          %s187 = sshll.u32 %s180, 4
          %s188 = int_to_ptr.vmem [resolvable:$true] %s187
          %193 = dma.hbm_to_vmem [thread:$0]  %s186, 2048, %s188, %s177, 128, 128, 8
        $region24: #{tpu_custom_call.1} parent=15 // pred_fallthru
          _
        // Predicated region
        $region25: #{tpu_custom_call.1} parent=15 // pred_check
          %p194 = pneg %p102
        $region26: #{tpu_custom_call.1} parent=15 // pred_check_branch
          %196 = sbr.rel (%p194) target = $region28
        $region27: #{tpu_custom_call.1} parent=15 // pred_region
          %p197 = scmp.lt.s32.totalorder %s25, 3
          %s198 = scalar_select %p197, %s25, 3
          %s199 = scalar_lea.vmem %s2, %s198
        $region28: #{tpu_custom_call.1} parent=15 // pred_fallthru
          _
      $region16: #{tpu_custom_call.1} parent=5 // pred_fallthru
        _
      %p200 = scmp.le.s32.totalorder 1, %s18
      %p201 = scmp.lt.s32.totalorder %s18, 17
      %p202 = pnand %p200, %p201
      %p203 = pneg %p202
      // Predicated region
      $region29: #{tpu_custom_call.1} parent=5 // pred_check
        _
      $region30: #{tpu_custom_call.1} parent=5 // pred_check_branch
        %205 = sbr.rel (%p202) target = $region32
      $region31: #{tpu_custom_call.1} parent=5 // pred_region
        %s206 = ssub.s32 %s18, 1
        %s207 = sand.u32 %s43, 1
        %s208 = scalar_lea.sflag [#allocation4], %s207
        %s209 = sand.u32 %s43, 1
        %s210 = smul.addr %s209, 8
        %s211 = scalar_lea.vmem [#allocation3], %s210
        // Predicated region
        $region33: #{tpu_custom_call.1} parent=31 // pred_check
          %p212 = pneg %p56
        $region34: #{tpu_custom_call.1} parent=31 // pred_check_branch
          %214 = sbr.rel (%p212) target = $region36
        $region35: #{tpu_custom_call.1} parent=31 // pred_region
          %215 = dma.done %s208, 128
        $region36: #{tpu_custom_call.1} parent=31 // pred_fallthru
          _
        %s216 = sand.u32 %s69, 1
        %s217 = scalar_lea.sflag [#allocation7], %s216
        %s218 = sand.u32 %s69, 1
        %s219 = smul.addr %s218, 128
        %s220 = scalar_lea.vmem [#allocation6], %s219
        // Predicated region
        $region37: #{tpu_custom_call.1} parent=31 // pred_check
          %p221 = pneg %p82
        $region38: #{tpu_custom_call.1} parent=31 // pred_check_branch
          %223 = sbr.rel (%p221) target = $region40
        $region39: #{tpu_custom_call.1} parent=31 // pred_region
          %224 = dma.done %s217, 2048
        $region40: #{tpu_custom_call.1} parent=31 // pred_fallthru
          _
        %s225 = sand.u32 %s43, 1
        %s226 = scalar_lea.sflag [#allocation4], %s225
        %s227 = sand.u32 %s43, 1
        %s228 = smul.addr %s227, 8
        %s229 = scalar_lea.vmem [#allocation3], %s228
        %p230 = pneg %p56
        %p231 = pneg %p53
        %s232 = sand.u32 %s69, 1
        %s233 = scalar_lea.sflag [#allocation7], %s232
        %s234 = sand.u32 %s69, 1
        %s235 = smul.addr %s234, 128
        %s236 = scalar_lea.vmem [#allocation6], %s235
        %p237 = pneg %p82
        %p238 = pneg %p79
        %p239 = scmp.lt.s32.totalorder %s27, 3
        %s240 = scalar_select %p239, %s27, 3
        %s241 = scalar_lea.vmem %s2, %s240
        %p242 = pneg %p108
        %p243 = pneg %p105
        %p244 = pneg %p136
        %p245 = pneg %p133
        %s246 = sand.u32 %s123, 1
        %s247 = scalar_lea.sflag [#allocation5], %s246
        %s248 = sand.u32 %s123, 1
        %s249 = smul.addr %s248, 8
        %s250 = scalar_lea.vmem [#allocation8], %s249
        %s251 = smul.u32 16, %s27
        %p252 = scmp.lt.s32.totalorder %s27, 3
        %s253 = scalar_select %p252, %s27, 3
        %s254 = scalar_lea.vmem %s2, %s253
        %p255 = scmp.eq.s32.totalorder %s28, 0
        // Predicated region
        $region41: #{tpu_custom_call.1} parent=31 // pred_check
          %p256 = pneg %p255
        $region42: #{tpu_custom_call.1} parent=31 // pred_check_branch
          %258 = sbr.rel (%p256) target = $region44
        $region43: #{tpu_custom_call.1} parent=31 // pred_region
          %v259 = vld [vmem:[%s220] sm:$0xff]
          %v260 = vld [vmem:[%s220 + $0x8] sm:$0xff]
          %v261 = vld [vmem:[%s220 + $0x10] sm:$0xff]
          %v262 = vld [vmem:[%s220 + $0x18] sm:$0xff]
          %v263 = vld [vmem:[%s220 + $0x20] sm:$0xff]
          %v264 = vld [vmem:[%s220 + $0x28] sm:$0xff]
          %v265 = vld [vmem:[%s220 + $0x30] sm:$0xff]
          %v266 = vld [vmem:[%s220 + $0x38] sm:$0xff]
          %v267 = vld [vmem:[%s220 + $0x40] sm:$0xff]
          %v268 = vld [vmem:[%s220 + $0x48] sm:$0xff]
          %v269 = vld [vmem:[%s220 + $0x50] sm:$0xff]
          %v270 = vld [vmem:[%s220 + $0x58] sm:$0xff]
          %v271 = vld [vmem:[%s220 + $0x60] sm:$0xff]
          %v272 = vld [vmem:[%s220 + $0x68] sm:$0xff]
          %v273 = vld [vmem:[%s220 + $0x70] sm:$0xff]
          %v274 = vld [vmem:[%s220 + $0x78] sm:$0xff]
          %v275 = vmul.f32 %v259, %v259
          %v276 = vmul.f32 %v260, %v260
          %v277 = vmul.f32 %v261, %v261
          %v278 = vmul.f32 %v262, %v262
          %v279 = vmul.f32 %v263, %v263
          %v280 = vmul.f32 %v264, %v264
          %v281 = vmul.f32 %v265, %v265
          %v282 = vmul.f32 %v266, %v266
          %v283 = vmul.f32 %v267, %v267
          %v284 = vmul.f32 %v268, %v268
          %v285 = vmul.f32 %v269, %v269
          %v286 = vmul.f32 %v270, %v270
          %v287 = vmul.f32 %v271, %v271
          %v288 = vmul.f32 %v272, %v272
          %v289 = vmul.f32 %v273, %v273
          %v290 = vmul.f32 %v274, %v274
          %291 = vadd.xlane.f32.xlu0 %v275
          %v292 = vpop.xlane.xlu0 %291
          %293 = vadd.xlane.f32.xlu0 %v276
          %v294 = vpop.xlane.xlu0 %293
          %295 = vadd.xlane.f32.xlu0 %v277
          %v296 = vpop.xlane.xlu0 %295
          %297 = vadd.xlane.f32.xlu0 %v278
          %v298 = vpop.xlane.xlu0 %297
          %299 = vadd.xlane.f32.xlu0 %v279
          %v300 = vpop.xlane.xlu0 %299
          %301 = vadd.xlane.f32.xlu0 %v280
          %v302 = vpop.xlane.xlu0 %301
          %303 = vadd.xlane.f32.xlu0 %v281
          %v304 = vpop.xlane.xlu0 %303
          %305 = vadd.xlane.f32.xlu0 %v282
          %v306 = vpop.xlane.xlu0 %305
          %307 = vadd.xlane.f32.xlu0 %v283
          %v308 = vpop.xlane.xlu0 %307
          %309 = vadd.xlane.f32.xlu0 %v284
          %v310 = vpop.xlane.xlu0 %309
          %311 = vadd.xlane.f32.xlu0 %v285
          %v312 = vpop.xlane.xlu0 %311
          %313 = vadd.xlane.f32.xlu0 %v286
          %v314 = vpop.xlane.xlu0 %313
          %315 = vadd.xlane.f32.xlu0 %v287
          %v316 = vpop.xlane.xlu0 %315
          %317 = vadd.xlane.f32.xlu0 %v288
          %v318 = vpop.xlane.xlu0 %317
          %319 = vadd.xlane.f32.xlu0 %v289
          %v320 = vpop.xlane.xlu0 %319
          %321 = vadd.xlane.f32.xlu0 %v290
          %v322 = vpop.xlane.xlu0 %321
          %v323 = vmax.f32 %v292, 1e-24
          %v324 = vmax.f32 %v294, 1e-24
          %v325 = vmax.f32 %v296, 1e-24
          %v326 = vmax.f32 %v298, 1e-24
          %v327 = vmax.f32 %v300, 1e-24
          %v328 = vmax.f32 %v302, 1e-24
          %v329 = vmax.f32 %v304, 1e-24
          %v330 = vmax.f32 %v306, 1e-24
          %v331 = vmax.f32 %v308, 1e-24
          %v332 = vmax.f32 %v310, 1e-24
          %v333 = vmax.f32 %v312, 1e-24
          %v334 = vmax.f32 %v314, 1e-24
          %v335 = vmax.f32 %v316, 1e-24
          %v336 = vmax.f32 %v318, 1e-24
          %v337 = vmax.f32 %v320, 1e-24
          %v338 = vmax.f32 %v322, 1e-24
          %v339 = vrsqrt.pop %v323
          %v340 = vrsqrt.pop %v324
          %v341 = vrsqrt.pop %v325
          %v342 = vrsqrt.pop %v326
          %v343 = vrsqrt.pop %v327
          %v344 = vrsqrt.pop %v328
          %v345 = vrsqrt.pop %v329
          %v346 = vrsqrt.pop %v330
          %v347 = vrsqrt.pop %v331
          %v348 = vrsqrt.pop %v332
          %v349 = vrsqrt.pop %v333
          %v350 = vrsqrt.pop %v334
          %v351 = vrsqrt.pop %v335
          %v352 = vrsqrt.pop %v336
          %v353 = vrsqrt.pop %v337
          %v354 = vrsqrt.pop %v338
          %v371 = vlaneseq
          %v372 = vand.u32 %v371, 127
          %v373 = vlaneseq
          %v374 = vshrl.u32 %v373, 7
          %v375 = vsub.s32 %v372, %v374
          %v376 = vrot.slane %v339, %v375
          %v377 = vadd.s32 %v372, 4294967288
          %v378 = vlaneseq
          %v379 = vshrl.u32 %v378, 7
          %v380 = vsub.s32 %v377, %v379
          %v381 = vrot.slane %v340, %v380
          %vm382 = vcmask 130112
          %v383 = vsel %vm382, %v381, %v376
          %v384 = vadd.s32 %v372, 4294967280
          %v385 = vlaneseq
          %v386 = vshrl.u32 %v385, 7
          %v387 = vsub.s32 %v384, %v386
          %v388 = vrot.slane %v341, %v387
          %vm389 = vcmask 195712
          %v390 = vsel %vm389, %v388, %v383
          %v391 = vadd.s32 %v372, 4294967272
          %v392 = vlaneseq
          %v393 = vshrl.u32 %v392, 7
          %v394 = vsub.s32 %v391, %v393
          %v395 = vrot.slane %v342, %v394
          %vm396 = vcmask 261312
          %v397 = vsel %vm396, %v395, %v390
          %v398 = vadd.s32 %v372, 4294967264
          %v399 = vlaneseq
          %v400 = vshrl.u32 %v399, 7
          %v401 = vsub.s32 %v398, %v400
          %v402 = vrot.slane %v343, %v401
          %vm403 = vcmask 326912
          %v404 = vsel %vm403, %v402, %v397
          %v405 = vadd.s32 %v372, 4294967256
          %v406 = vlaneseq
          %v407 = vshrl.u32 %v406, 7
          %v408 = vsub.s32 %v405, %v407
          %v409 = vrot.slane %v344, %v408
          %vm410 = vcmask 392512
          %v411 = vsel %vm410, %v409, %v404
          %v412 = vadd.s32 %v372, 4294967248
          %v413 = vlaneseq
          %v414 = vshrl.u32 %v413, 7
          %v415 = vsub.s32 %v412, %v414
          %v416 = vrot.slane %v345, %v415
          %vm417 = vcmask 458112
          %v418 = vsel %vm417, %v416, %v411
          %v419 = vadd.s32 %v372, 4294967240
          %v420 = vlaneseq
          %v421 = vshrl.u32 %v420, 7
          %v422 = vsub.s32 %v419, %v421
          %v423 = vrot.slane %v346, %v422
          %vm424 = vcmask 523712
          %v425 = vsel %vm424, %v423, %v418
          %v426 = vadd.s32 %v372, 4294967232
          %v427 = vlaneseq
          %v428 = vshrl.u32 %v427, 7
          %v429 = vsub.s32 %v426, %v428
          %v430 = vrot.slane %v347, %v429
          %vm431 = vcmask 589312
          %v432 = vsel %vm431, %v430, %v425
          %v433 = vadd.s32 %v372, 4294967224
          %v434 = vlaneseq
          %v435 = vshrl.u32 %v434, 7
          %v436 = vsub.s32 %v433, %v435
          %v437 = vrot.slane %v348, %v436
          %vm438 = vcmask 654912
          %v439 = vsel %vm438, %v437, %v432
          %v440 = vadd.s32 %v372, 4294967216
          %v441 = vlaneseq
          %v442 = vshrl.u32 %v441, 7
          %v443 = vsub.s32 %v440, %v442
          %v444 = vrot.slane %v349, %v443
          %vm445 = vcmask 720512
          %v446 = vsel %vm445, %v444, %v439
          %v447 = vadd.s32 %v372, 4294967208
          %v448 = vlaneseq
          %v449 = vshrl.u32 %v448, 7
          %v450 = vsub.s32 %v447, %v449
          %v451 = vrot.slane %v350, %v450
          %vm452 = vcmask 786112
          %v453 = vsel %vm452, %v451, %v446
          %v454 = vadd.s32 %v372, 4294967200
          %v455 = vlaneseq
          %v456 = vshrl.u32 %v455, 7
          %v457 = vsub.s32 %v454, %v456
          %v458 = vrot.slane %v351, %v457
          %vm459 = vcmask 851712
          %v460 = vsel %vm459, %v458, %v453
          %v461 = vadd.s32 %v372, 4294967192
          %v462 = vlaneseq
          %v463 = vshrl.u32 %v462, 7
          %v464 = vsub.s32 %v461, %v463
          %v465 = vrot.slane %v352, %v464
          %vm466 = vcmask 917312
          %v467 = vsel %vm466, %v465, %v460
          %v468 = vadd.s32 %v372, 4294967184
          %v469 = vlaneseq
          %v470 = vshrl.u32 %v469, 7
          %v471 = vsub.s32 %v468, %v470
          %v472 = vrot.slane %v353, %v471
          %vm473 = vcmask 982912
          %v474 = vsel %vm473, %v472, %v467
          %v475 = vadd.s32 %v372, 4294967176
          %v476 = vlaneseq
          %v477 = vshrl.u32 %v476, 7
          %v478 = vsub.s32 %v475, %v477
          %v479 = vrot.slane %v354, %v478
          %vm480 = vcmask 1048512
          %v481 = vsel %vm480, %v479, %v474
          %483 = vst [vmem:[#allocation2] sm:$0x1] %v481
        $region44: #{tpu_custom_call.1} parent=31 // pred_fallthru
          _
        %v484 = vld [vmem:[%s211] sm:$0xff]
        %v485 = vld [vmem:[%s220] sm:$0xff]
        %v486 = vld [vmem:[%s220 + $0x8] sm:$0xff]
        %v487 = vld [vmem:[%s220 + $0x10] sm:$0xff]
        %v488 = vld [vmem:[%s220 + $0x18] sm:$0xff]
        %v489 = vld [vmem:[%s220 + $0x20] sm:$0xff]
        %v490 = vld [vmem:[%s220 + $0x28] sm:$0xff]
        %v491 = vld [vmem:[%s220 + $0x30] sm:$0xff]
        %v492 = vld [vmem:[%s220 + $0x38] sm:$0xff]
        %v493 = vld [vmem:[%s220 + $0x40] sm:$0xff]
        %v494 = vld [vmem:[%s220 + $0x48] sm:$0xff]
        %v495 = vld [vmem:[%s220 + $0x50] sm:$0xff]
        %v496 = vld [vmem:[%s220 + $0x58] sm:$0xff]
        %v497 = vld [vmem:[%s220 + $0x60] sm:$0xff]
        %v498 = vld [vmem:[%s220 + $0x68] sm:$0xff]
        %v499 = vld [vmem:[%s220 + $0x70] sm:$0xff]
        %v500 = vld [vmem:[%s220 + $0x78] sm:$0xff]
        %501 = vmatprep.subr.mxu0 0.0
        %502 = vmatpush1.xpose.msra.mxu0 %v485
        %503 = vmatprep.subr.mxu0 0.0
        %504 = vmatpush1.xpose.msra.mxu0 %v486
        %505 = vmatprep.subr.mxu0 0.0
        %506 = vmatpush1.xpose.msra.mxu0 %v487
        %507 = vmatprep.subr.mxu0 0.0
        %508 = vmatpush1.xpose.msra.mxu0 %v488
        %509 = vmatprep.subr.mxu0 0.0
        %510 = vmatpush1.xpose.msra.mxu0 %v489
        %511 = vmatprep.subr.mxu0 0.0
        %512 = vmatpush1.xpose.msra.mxu0 %v490
        %513 = vmatprep.subr.mxu0 0.0
        %514 = vmatpush1.xpose.msra.mxu0 %v491
        %515 = vmatprep.subr.mxu0 0.0
        %516 = vmatpush1.xpose.msra.mxu0 %v492
        %517 = vmatprep.subr.mxu0 0.0
        %518 = vmatpush1.xpose.msra.mxu0 %v493
        %519 = vmatprep.subr.mxu0 0.0
        %520 = vmatpush1.xpose.msra.mxu0 %v494
        %521 = vmatprep.subr.mxu0 0.0
        %522 = vmatpush1.xpose.msra.mxu0 %v495
        %523 = vmatprep.subr.mxu0 0.0
        %524 = vmatpush1.xpose.msra.mxu0 %v496
        %525 = vmatprep.subr.mxu0 0.0
        %526 = vmatpush1.xpose.msra.mxu0 %v497
        %527 = vmatprep.subr.mxu0 0.0
        %528 = vmatpush1.xpose.msra.mxu0 %v498
        %529 = vmatprep.subr.mxu0 0.0
        %530 = vmatpush1.xpose.msra.mxu0 %v499
        %531 = vmatprep.subr.mxu0 0.0
        %532 = vmatpush1.xpose.msra.mxu0 %v500
        %533 = vmatprep.subr.mxu0 0.0
        %534 = vmatpush1.xpose.msra.mxu0 0.0
        %535 = vmatprep.subr.mxu0 0.0
        %536 = vmatpush1.xpose.msra.mxu0 0.0
        %537 = vmatprep.subr.mxu0 0.0
        %538 = vmatpush1.xpose.msra.mxu0 0.0
        %539 = vmatprep.subr.mxu0 0.0
        %540 = vmatpush1.xpose.msra.mxu0 0.0
        %541 = vmatprep.subr.mxu0 0.0
        %542 = vmatpush1.xpose.msra.mxu0 0.0
        %543 = vmatprep.subr.mxu0 0.0
        %544 = vmatpush1.xpose.msra.mxu0 0.0
        %545 = vmatprep.subr.mxu0 0.0
        %546 = vmatpush1.xpose.msra.mxu0 0.0
        %547 = vmatprep.subr.mxu0 0.0
        %548 = vmatpush1.xpose.msra.mxu0 0.0
        %549 = vmatprep.subr.mxu0 0.0
        %550 = vmatpush1.xpose.msra.mxu0 0.0
        %551 = vmatprep.subr.mxu0 0.0
        %552 = vmatpush1.xpose.msra.mxu0 0.0
        %553 = vmatprep.subr.mxu0 0.0
        %554 = vmatpush1.xpose.msra.mxu0 0.0
        %555 = vmatprep.subr.mxu0 0.0
        %556 = vmatpush1.xpose.msra.mxu0 0.0
        %557 = vmatprep.subr.mxu0 0.0
        %558 = vmatpush1.xpose.msra.mxu0 0.0
        %559 = vmatprep.subr.mxu0 0.0
        %560 = vmatpush1.xpose.msra.mxu0 0.0
        %561 = vmatprep.subr.mxu0 0.0
        %562 = vmatpush1.xpose.msra.mxu0 0.0
        %563 = vmatprep.subr.mxu0 0.0
        %564 = vmatpush1.xpose.msra.mxu0 0.0
        %565 = vmatprep.mubr.f32.mxu0 0.0
        %566 = vmatmul.mubr.f32.gmra.mrb[0].mxu0 %v484
        %v567 = vpop.f32.mrb[0].mxu0
        %v568 = vadd.f32 0.0, %v567
        %v569 = vpop.f32.mrb[0].mxu0
        %570 = vdwg.mxu0
        %v571 = vld [vmem:[#allocation2] sm:$0x1]
        %v573 = vlaneseq
        %v574 = vshrl.u32 %v573, 7
        %v575 = vsub.s32 0, %v574
        %v576 = vrot.slane %v571, %v575
        %v578 = vmul.f32 %v568, %v576
        %v579 = vld [vmem:[%s254] sm:$0x1]
        %v581 = vlaneseq
        %v582 = vshrl.u32 %v581, 7
        %v583 = vsub.s32 0, %v582
        %v584 = vrot.slane %v579, %v583
        %v586 = vadd.f32 %v578, %v584
        %587 = vst [vmem:[%s250] sm:$0xff] %v586
        %s588 = sand.u32 %s123, 1
        %s589 = scalar_lea.sflag [#allocation5], %s588
        %s590 = sand.u32 %s123, 1
        %s591 = smul.addr %s590, 8
        %s592 = scalar_lea.vmem [#allocation8], %s591
        // Predicated region
        $region45: #{tpu_custom_call.1} parent=31 // pred_check
          %p593 = pneg %p133
        $region46: #{tpu_custom_call.1} parent=31 // pred_check_branch
          %595 = sbr.rel (%p593) target = $region48
        $region47: #{tpu_custom_call.1} parent=31 // pred_region
          %s597 = ssub.s32 128, 128
          %598 = vsyncadd %s589, %s597
          %s599 = smul.addr %s28, 4
          %s600 = sadd.s32 %s27, %s599
          %s601 = smul.addr %s600, 128
          %s602 = scalar_lea.hbm %s3, %s601
          %s604 = sshll.u32 %s592, 4
          %s605 = int_to_ptr.vmem [resolvable:$true] %s604
          %607 = dma.vmem_to_hbm [thread:$0]  %s605, 128, %s602, %s589
        $region48: #{tpu_custom_call.1} parent=31 // pred_fallthru
          _
      $region32: #{tpu_custom_call.1} parent=5 // pred_fallthru
        _
      %p608 = scmp.le.s32.totalorder 2, %s18
      // Predicated region
      $region49: #{tpu_custom_call.1} parent=5 // pred_check
        %p609 = pneg %p608
      $region50: #{tpu_custom_call.1} parent=5 // pred_check_branch
        %611 = sbr.rel (%p609) target = $region52
      $region51: #{tpu_custom_call.1} parent=5 // pred_region
        %s612 = ssub.s32 %s18, 2
        // Predicated region
        $region53: #{tpu_custom_call.1} parent=51 // pred_check
          %p613 = pneg %p139
        $region54: #{tpu_custom_call.1} parent=51 // pred_check_branch
          %615 = sbr.rel (%p613) target = $region56
        $region55: #{tpu_custom_call.1} parent=51 // pred_region
          %s616 = sand.u32 %s124, 1
          %s617 = scalar_lea.sflag [#allocation5], %s616
          %s618 = sand.u32 %s124, 1
          %s619 = smul.addr %s618, 8
          %s620 = scalar_lea.vmem [#allocation8], %s619
          %621 = dma.done %s617, 128
        $region56: #{tpu_custom_call.1} parent=51 // pred_fallthru
          _
      $region52: #{tpu_custom_call.1} parent=5 // pred_fallthru
        _
    $region6: #{tpu_custom_call.1} parent=1 // loop_footer
      %s22 = sadd.s32 1, %s18
    $region7: #{tpu_custom_call.1} parent=1 // loop_footer_branch
      %17 = sbr.rel target = $region3
    $region8: #{tpu_custom_call.1} parent=1 // loop_exit
      _
    %622 = vsyncpa [#allocation4], 1
    %s623 = scalar_lea.sflag [#allocation4], 1
    %624 = vsyncpa %s623, 1
    %625 = vsyncpa [#allocation7], 1
    %s626 = scalar_lea.sflag [#allocation7], 1
    %627 = vsyncpa %s626, 1
    %628 = vsyncpa [#allocation5], 1
    %s629 = scalar_lea.sflag [#allocation5], 1
    %630 = vsyncpa %s629, 1

</llo_original>
